<compile_context>
chip_gen: v7x
topology: tpu7x:2x2x1
jax: 0.10.0
libtpu: 0.0.40
codegen_flags: <defaults>
</compile_context>

<pallas_src>
import functools

import jax
import jax.numpy as jnp
from jax.experimental import pallas as pl
from jax.experimental.pallas import tpu as pltpu

KERNEL_SIZE = 5


def _cdiv(a, b):
    return -(-a // b)


def _round_up(a, b):
    return _cdiv(a, b) * b


# --------------------------------------------------------------------------
# Fused kernel: conv-as-matmul + ReLU + tree max-pool + highway stack.
# --------------------------------------------------------------------------
def _char_embed_kernel(xf_ref, wbig_ref, bconv_ref, whw_ref, bhw_ref, o_ref,
                       *, lout, p_pad, num_layers):
    # xf_ref:   (TW, CLp)        flat per-word embeddings (zero padded)
    # wbig_ref: (CLp, lout*P)    expanded conv weight, one 128-lane slab per position
    # bconv_ref:(1, P)           conv bias (zero padded to P)
    # whw_ref:  (L, P, 2*P)      fused [gate | transform] weights (x @ W layout)
    # bhw_ref:  (L, 1, 2*P)
    # o_ref:    (TW, P)          lane-dense padded output tile
    P = p_pad
    x = xf_ref[...]
    s = jnp.dot(x, wbig_ref[...], preferred_element_type=jnp.float32)   # (TW, lout*P)

    # Max-pool over conv positions: each slice is a whole 128-lane slab (pure
    # VPU vmax, no relayout); pairwise tree keeps the dependency chain short.
    parts = [s[:, p * P:(p + 1) * P] for p in range(lout)]
    while len(parts) > 1:
        nxt = [jnp.maximum(parts[i], parts[i + 1])
               for i in range(0, len(parts) - 1, 2)]
        if len(parts) % 2:
            nxt.append(parts[-1])
        parts = nxt
    # ReLU and the (position-independent) bias commute with max -> apply once.
    h = jnp.maximum(parts[0] + bconv_ref[...], 0.0)                      # (TW, P)

    # Highway stack: one fused (TW,P)@(P,2P) matmul per layer; the gate /
    # transform split is exactly on a 128-lane tile boundary.
    for l in range(num_layers):
        z = jnp.dot(h, whw_ref[l], preferred_element_type=jnp.float32) + bhw_ref[l]
        g = jax.nn.sigmoid(z[:, :P])
        t = jnp.maximum(z[:, P:], 0.0)
        h = g * t + (1.0 - g) * h

    o_ref[...] = h.astype(o_ref.dtype)


# --------------------------------------------------------------------------
# Parameter preprocessing: fold the module's reshape + Conv1d into a single
# (CLp, Lout*P) matrix so the conv is one matmul over the flat embedding.
# The module computes conv on x_r[n, c, l] = flat[n, c*Lc + l], i.e. for flat
# index j: channel = j // Lc, position = j % Lc.  Each conv position's e_word
# block is zero-padded to P (=128) columns so it starts on a lane boundary.
# --------------------------------------------------------------------------
def _build_conv_matrix(w_conv, Lc, Lout, CLp, P):
    e_word, e_char, K = w_conv.shape
    CL = e_char * Lc
    j = jnp.arange(CL)
    c_idx = j // Lc                                   # channel of flat index j
    l_idx = j % Lc                                    # position of flat index j
    p = jnp.arange(Lout)
    k = l_idx[:, None] - p[None, :]                   # (CL, Lout) tap index
    valid = (k >= 0) & (k < K)
    k_c = jnp.clip(k, 0, K - 1)
    gathered = w_conv[:, c_idx[:, None], k_c]         # (e_word, CL, Lout)
    w_big = jnp.where(valid[None, :, :], gathered, 0.0)
    w_big = jnp.transpose(w_big, (1, 2, 0))           # (CL, Lout, e_word)
    if P != e_word:
        w_big = jnp.pad(w_big, ((0, 0), (0, 0), (0, P - e_word)))
    w_big = w_big.reshape(CL, Lout * P)
    if CLp != CL:
        w_big = jnp.pad(w_big, ((0, CLp - CL), (0, 0)))
    return w_big


def _pick_tile(n, clp, p_pad, lout, budget_bytes=20 * 1024 * 1024):
    # Rough per-word VMEM footprint (f32): double-buffered in/out tiles, the
    # (lout*P)-wide conv intermediate, and a few highway temporaries.
    per_row = 4 * (2 * clp + 2 * p_pad + lout * p_pad + 8 * p_pad)
    tw = max(8, min(1024, budget_bytes // per_row))
    tw = (tw // 8) * 8
    if n <= tw:
        return _round_up(max(n, 1), 8)
    return tw


# --------------------------------------------------------------------------
# Full CharEmbedding forward
# --------------------------------------------------------------------------
def char_embedding_forward(x_idx, params):
    B, S, Lc = x_idx.shape
    cv = params["char_vectors"]
    e_char = cv.shape[1]
    w_conv = params["w_conv"]
    e_word = w_conv.shape[0]
    K = KERNEL_SIZE
    Lout = Lc - K + 1
    N = B * S
    P = max(128, _round_up(e_word, 128))              # lane-padded e_word

    # Embedding gather kept as XLA glue (tiny table); flat per-word layout.
    # TODO(synk): fuse the char-vector gather into the kernel (table fits in
    # VMEM) so only int32 indices cross HBM instead of the (N, CL) f32 buffer.
    emb = cv[x_idx]                                   # (B, S, Lc, e_char)
    x_flat = emb.reshape(N, Lc * e_char)              # == module's reshape buffer

    CL = Lc * e_char
    CLp = max(128, _round_up(CL, 128))
    if CLp != CL:
        x_flat = jnp.pad(x_flat, ((0, 0), (0, CLp - CL)))

    w_big = _build_conv_matrix(w_conv, Lc, Lout, CLp, P)          # (CLp, Lout*P)
    b_conv = jnp.pad(params["b_conv"], (0, P - e_word)).reshape(1, P)

    # Fused highway weights: [gate | transform] along the output axis, zero
    # padded to P so both the matmul and the split are 128-lane aligned.
    def _pad_w(w):    # (L, e_word, e_word) torch-Linear weight -> (L, P, P), x@W layout
        wt = jnp.transpose(w, (0, 2, 1))
        return jnp.pad(wt, ((0, 0), (0, P - e_word), (0, P - e_word)))

    def _pad_b(b):    # (L, e_word) -> (L, P)
        return jnp.pad(b, ((0, 0), (0, P - e_word)))

    w_hw = jnp.concatenate([_pad_w(params["wg"]), _pad_w(params["wt"])], axis=2)   # (L, P, 2P)
    b_hw = jnp.concatenate([_pad_b(params["bg"]), _pad_b(params["bt"])],
                           axis=1)[:, None, :]                                     # (L, 1, 2P)
    num_layers = w_hw.shape[0]

    TW = _pick_tile(N, CLp, P, Lout)
    N_pad = _round_up(N, TW)
    if N_pad != N:
        x_flat = jnp.pad(x_flat, ((0, N_pad - N), (0, 0)))
    num_tiles = N_pad // TW

    # NOTE: pipeline_mode=pl.Buffered(1) on the constant-index weight blocks
    # would save their second buffer; skipped since VMEM headroom is ample here.
    out = pl.pallas_call(
        functools.partial(_char_embed_kernel, lout=Lout, p_pad=P,
                          num_layers=num_layers),
        out_shape=jax.ShapeDtypeStruct((N_pad, P), jnp.float32),
        grid=(num_tiles,),
        in_specs=[
            pl.BlockSpec((TW, CLp), lambda i: (i, 0)),
            pl.BlockSpec((CLp, Lout * P), lambda i: (0, 0)),
            pl.BlockSpec((1, P), lambda i: (0, 0)),
            pl.BlockSpec((num_layers, P, 2 * P), lambda i: (0, 0, 0)),
            pl.BlockSpec((num_layers, 1, 2 * P), lambda i: (0, 0, 0)),
        ],
        out_specs=pl.BlockSpec((TW, P), lambda i: (i, 0)),
        compiler_params=pltpu.CompilerParams(
            dimension_semantics=("parallel",),
            vmem_limit_bytes=32 * 1024 * 1024,
        ),
    )(x_flat, w_big, b_conv, w_hw, b_hw)

    out2d = out[:N, :e_word]
    # TODO(synk): F.dropout implemented as eval-mode identity (no RNG mask applied).
    return out2d.reshape(B, S, e_word)


# --------------------------------------------------------------------------
# Pure-JAX reference for verification (mirrors the PyTorch module exactly).
# --------------------------------------------------------------------------
def reference_forward(x_idx, params):
    B, S, Lc = x_idx.shape
    emb = params["char_vectors"][x_idx]
    e_char = emb.shape[-1]
    x_r = emb.reshape(B * S, e_char, Lc)               # module's quirky reshape
    conv = jax.lax.conv_general_dilated(
        x_r, params["w_conv"], window_strides=(1,), padding="VALID",
        dimension_numbers=("NCH", "OIH", "NCH"))
    conv = conv + params["b_conv"][None, :, None]
    conv = jnp.maximum(conv, 0.0)
    pooled = jnp.max(conv, axis=-1)                    # (B*S, e_word)
    h = pooled
    for l in range(params["wg"].shape[0]):
        g = jax.nn.sigmoid(h @ params["wg"][l].T + params["bg"][l])
        t = jnp.maximum(h @ params["wt"][l].T + params["bt"][l], 0.0)
        h = g * t + (1.0 - g) * h
    return h.reshape(B, S, -1)


if __name__ == "__main__":
    # Small, module-consistent shapes
    B, S, Lc = 2, 8, 16            # batch, words per example, chars per word
    vocab = 50
    e_char, e_word = 8, 32
    num_highway_layers = 2
    drop_prob = 0.1                # unused at eval time

    key = jax.random.PRNGKey(0)
    ks = jax.random.split(key, 8)
    params = {
        "char_vectors": jax.random.normal(ks[0], (vocab, e_char), jnp.float32) * 0.1,
        "w_conv": jax.random.normal(ks[1], (e_word, e_char, KERNEL_SIZE), jnp.float32) * 0.1,
        "b_conv": jax.random.normal(ks[2], (e_word,), jnp.float32) * 0.1,
        "wg": jax.random.normal(ks[3], (num_highway_layers, e_word, e_word), jnp.float32) * 0.1,
        "bg": jax.random.normal(ks[4], (num_highway_layers, e_word), jnp.float32) * 0.1,
        "wt": jax.random.normal(ks[5], (num_highway_layers, e_word, e_word), jnp.float32) * 0.1,
        "bt": jax.random.normal(ks[6], (num_highway_layers, e_word), jnp.float32) * 0.1,
    }
    x_idx = jax.random.randint(ks[7], (B, S, Lc), 0, vocab, dtype=jnp.int32)

    out = jax.block_until_ready(char_embedding_forward(x_idx, params))
    ref = jax.block_until_ready(reference_forward(x_idx, params))

    assert out.shape == (B, S, e_word), out.shape
    assert jnp.allclose(out, ref, rtol=1e-5, atol=1e-5), float(jnp.max(jnp.abs(out - ref)))
    print("KERNEL_OK")
</pallas_src>

<mosaic_0001>
module attributes {stable_mosaic.version = 11 : i64} {
  func.func @_char_embed_kernel(%arg0: i32, %arg1: memref<16x128xf32, #tpu.memory_space<vmem>>, %arg2: memref<128x1536xf32, #tpu.memory_space<vmem>>, %arg3: memref<1x128xf32, #tpu.memory_space<vmem>>, %arg4: memref<2x128x256xf32, #tpu.memory_space<vmem>>, %arg5: memref<2x1x256xf32, #tpu.memory_space<vmem>>, %arg6: memref<16x128xf32, #tpu.memory_space<vmem>>) attributes {dimension_semantics = [#tpu.dimension_semantics<parallel>], iteration_bounds = array<i64: 1>, scalar_prefetch = 0 : i64, scratch_operands = 0 : i64, tpu.core_type = #tpu.core_type<tc>, window_params = [{transform_indices = @transform_0, window_bounds = array<i64: 16, 128>}, {pipeline_mode = #tpu.pipeline_mode<synchronous>, transform_indices = @transform_1, window_bounds = array<i64: 128, 1536>}, {pipeline_mode = #tpu.pipeline_mode<synchronous>, transform_indices = @transform_2, window_bounds = array<i64: 1, 128>}, {pipeline_mode = #tpu.pipeline_mode<synchronous>, transform_indices = @transform_3, window_bounds = array<i64: 2, 128, 256>}, {pipeline_mode = #tpu.pipeline_mode<synchronous>, transform_indices = @transform_4, window_bounds = array<i64: 2, 1, 256>}, {transform_indices = @transform_5, window_bounds = array<i64: 16, 128>}]} {
    %c0 = arith.constant 0 : index
    %c0_0 = arith.constant 0 : index
    %0 = vector.load %arg1[%c0, %c0_0] : memref<16x128xf32, #tpu.memory_space<vmem>>, vector<16x128xf32>
    %c0_1 = arith.constant 0 : index
    %c0_2 = arith.constant 0 : index
    %1 = vector.load %arg2[%c0_1, %c0_2] : memref<128x1536xf32, #tpu.memory_space<vmem>>, vector<128x1536xf32>
    %cst = arith.constant dense<0.000000e+00> : vector<16x1536xf32>
    %2 = tpu.matmul %0, %1, %cst {dimension_numbers = #tpu.dot_dimension_numbers<[1], [0], [0], [1], [0, 0, 1, 1], [], []>} : vector<16x128xf32>, vector<128x1536xf32>, vector<16x1536xf32> -> vector<16x1536xf32>
    %3 = vector.extract_strided_slice %2 {offsets = [0, 0], sizes = [16, 128], strides = [1, 1]} : vector<16x1536xf32> to vector<16x128xf32>
    %4 = vector.extract_strided_slice %2 {offsets = [0, 128], sizes = [16, 128], strides = [1, 1]} : vector<16x1536xf32> to vector<16x128xf32>
    %5 = vector.extract_strided_slice %2 {offsets = [0, 256], sizes = [16, 128], strides = [1, 1]} : vector<16x1536xf32> to vector<16x128xf32>
    %6 = vector.extract_strided_slice %2 {offsets = [0, 384], sizes = [16, 128], strides = [1, 1]} : vector<16x1536xf32> to vector<16x128xf32>
    %7 = vector.extract_strided_slice %2 {offsets = [0, 512], sizes = [16, 128], strides = [1, 1]} : vector<16x1536xf32> to vector<16x128xf32>
    %8 = vector.extract_strided_slice %2 {offsets = [0, 640], sizes = [16, 128], strides = [1, 1]} : vector<16x1536xf32> to vector<16x128xf32>
    %9 = vector.extract_strided_slice %2 {offsets = [0, 768], sizes = [16, 128], strides = [1, 1]} : vector<16x1536xf32> to vector<16x128xf32>
    %10 = vector.extract_strided_slice %2 {offsets = [0, 896], sizes = [16, 128], strides = [1, 1]} : vector<16x1536xf32> to vector<16x128xf32>
    %11 = vector.extract_strided_slice %2 {offsets = [0, 1024], sizes = [16, 128], strides = [1, 1]} : vector<16x1536xf32> to vector<16x128xf32>
    %12 = vector.extract_strided_slice %2 {offsets = [0, 1152], sizes = [16, 128], strides = [1, 1]} : vector<16x1536xf32> to vector<16x128xf32>
    %13 = vector.extract_strided_slice %2 {offsets = [0, 1280], sizes = [16, 128], strides = [1, 1]} : vector<16x1536xf32> to vector<16x128xf32>
    %14 = vector.extract_strided_slice %2 {offsets = [0, 1408], sizes = [16, 128], strides = [1, 1]} : vector<16x1536xf32> to vector<16x128xf32>
    %15 = arith.maximumf %3, %4 : vector<16x128xf32>
    %16 = arith.maximumf %5, %6 : vector<16x128xf32>
    %17 = arith.maximumf %7, %8 : vector<16x128xf32>
    %18 = arith.maximumf %9, %10 : vector<16x128xf32>
    %19 = arith.maximumf %11, %12 : vector<16x128xf32>
    %20 = arith.maximumf %13, %14 : vector<16x128xf32>
    %21 = arith.maximumf %15, %16 : vector<16x128xf32>
    %22 = arith.maximumf %17, %18 : vector<16x128xf32>
    %23 = arith.maximumf %19, %20 : vector<16x128xf32>
    %24 = arith.maximumf %21, %22 : vector<16x128xf32>
    %25 = arith.maximumf %24, %23 : vector<16x128xf32>
    %c0_3 = arith.constant 0 : index
    %c0_4 = arith.constant 0 : index
    %26 = vector.load %arg3[%c0_3, %c0_4] : memref<1x128xf32, #tpu.memory_space<vmem>>, vector<1x128xf32>
    %27 = vector.broadcast %26 : vector<1x128xf32> to vector<16x128xf32>
    %28 = arith.addf %25, %27 : vector<16x128xf32>
    %cst_5 = arith.constant 0.000000e+00 : f32
    %29 = vector.broadcast %cst_5 : f32 to vector<16x128xf32>
    %30 = arith.maximumf %28, %29 : vector<16x128xf32>
    %c0_6 = arith.constant 0 : index
    %c0_7 = arith.constant 0 : index
    %c0_8 = arith.constant 0 : index
    %31 = vector.load %arg4[%c0_6, %c0_7, %c0_8] : memref<2x128x256xf32, #tpu.memory_space<vmem>>, vector<1x128x256xf32>
    %32 = vector.shape_cast %31 : vector<1x128x256xf32> to vector<128x256xf32>
    %cst_9 = arith.constant dense<0.000000e+00> : vector<16x256xf32>
    %33 = tpu.matmul %30, %32, %cst_9 {dimension_numbers = #tpu.dot_dimension_numbers<[1], [0], [0], [1], [0, 0, 1, 1], [], []>} : vector<16x128xf32>, vector<128x256xf32>, vector<16x256xf32> -> vector<16x256xf32>
    %c0_10 = arith.constant 0 : index
    %c0_11 = arith.constant 0 : index
    %c0_12 = arith.constant 0 : index
    %34 = vector.load %arg5[%c0_10, %c0_11, %c0_12] : memref<2x1x256xf32, #tpu.memory_space<vmem>>, vector<1x1x256xf32>
    %35 = vector.shape_cast %34 : vector<1x1x256xf32> to vector<1x256xf32>
    %36 = vector.broadcast %35 : vector<1x256xf32> to vector<16x256xf32>
    %37 = arith.addf %33, %36 : vector<16x256xf32>
    %38 = vector.extract_strided_slice %37 {offsets = [0, 0], sizes = [16, 128], strides = [1, 1]} : vector<16x256xf32> to vector<16x128xf32>
    %39 = arith.negf %38 : vector<16x128xf32>
    %40 = math.exp %39 : vector<16x128xf32>
    %cst_13 = arith.constant 1.000000e+00 : f32
    %41 = vector.broadcast %cst_13 : f32 to vector<16x128xf32>
    %42 = arith.addf %41, %40 : vector<16x128xf32>
    %43 = arith.divf %41, %42 : vector<16x128xf32>
    %44 = vector.extract_strided_slice %37 {offsets = [0, 128], sizes = [16, 128], strides = [1, 1]} : vector<16x256xf32> to vector<16x128xf32>
    %cst_14 = arith.constant 0.000000e+00 : f32
    %45 = vector.broadcast %cst_14 : f32 to vector<16x128xf32>
    %46 = arith.maximumf %44, %45 : vector<16x128xf32>
    %47 = arith.mulf %43, %46 : vector<16x128xf32>
    %cst_15 = arith.constant 1.000000e+00 : f32
    %48 = vector.broadcast %cst_15 : f32 to vector<16x128xf32>
    %49 = arith.subf %48, %43 : vector<16x128xf32>
    %50 = arith.mulf %49, %30 : vector<16x128xf32>
    %51 = arith.addf %47, %50 : vector<16x128xf32>
    %c1 = arith.constant 1 : index
    %c0_16 = arith.constant 0 : index
    %c0_17 = arith.constant 0 : index
    %52 = vector.load %arg4[%c1, %c0_16, %c0_17] : memref<2x128x256xf32, #tpu.memory_space<vmem>>, vector<1x128x256xf32>
    %53 = vector.shape_cast %52 : vector<1x128x256xf32> to vector<128x256xf32>
    %cst_18 = arith.constant dense<0.000000e+00> : vector<16x256xf32>
    %54 = tpu.matmul %51, %53, %cst_18 {dimension_numbers = #tpu.dot_dimension_numbers<[1], [0], [0], [1], [0, 0, 1, 1], [], []>} : vector<16x128xf32>, vector<128x256xf32>, vector<16x256xf32> -> vector<16x256xf32>
    %c1_19 = arith.constant 1 : index
    %c0_20 = arith.constant 0 : index
    %c0_21 = arith.constant 0 : index
    %55 = vector.load %arg5[%c1_19, %c0_20, %c0_21] : memref<2x1x256xf32, #tpu.memory_space<vmem>>, vector<1x1x256xf32>
    %56 = vector.shape_cast %55 : vector<1x1x256xf32> to vector<1x256xf32>
    %57 = vector.broadcast %56 : vector<1x256xf32> to vector<16x256xf32>
    %58 = arith.addf %54, %57 : vector<16x256xf32>
    %59 = vector.extract_strided_slice %58 {offsets = [0, 0], sizes = [16, 128], strides = [1, 1]} : vector<16x256xf32> to vector<16x128xf32>
    %60 = arith.negf %59 : vector<16x128xf32>
    %61 = math.exp %60 : vector<16x128xf32>
    %cst_22 = arith.constant 1.000000e+00 : f32
    %62 = vector.broadcast %cst_22 : f32 to vector<16x128xf32>
    %63 = arith.addf %62, %61 : vector<16x128xf32>
    %64 = arith.divf %62, %63 : vector<16x128xf32>
    %65 = vector.extract_strided_slice %58 {offsets = [0, 128], sizes = [16, 128], strides = [1, 1]} : vector<16x256xf32> to vector<16x128xf32>
    %cst_23 = arith.constant 0.000000e+00 : f32
    %66 = vector.broadcast %cst_23 : f32 to vector<16x128xf32>
    %67 = arith.maximumf %65, %66 : vector<16x128xf32>
    %68 = arith.mulf %64, %67 : vector<16x128xf32>
    %cst_24 = arith.constant 1.000000e+00 : f32
    %69 = vector.broadcast %cst_24 : f32 to vector<16x128xf32>
    %70 = arith.subf %69, %64 : vector<16x128xf32>
    %71 = arith.mulf %70, %51 : vector<16x128xf32>
    %72 = arith.addf %68, %71 : vector<16x128xf32>
    %c0_25 = arith.constant 0 : index
    %c0_26 = arith.constant 0 : index
    %73 = vector.load %arg6[%c0_25, %c0_26] : memref<16x128xf32, #tpu.memory_space<vmem>>, vector<16x128xf32>
    tpu.vector_store %arg6[%c0_25, %c0_26], %72 {strides = array<i32>} : memref<16x128xf32, #tpu.memory_space<vmem>>, vector<16x128xf32>,
    return
  }
  func.func @transform_0(%arg0: i32) -> (i32, i32) {
    %c0_i32 = arith.constant 0 : i32
    %c0_i32_0 = arith.constant 0 : i32
    return %arg0, %c0_i32 : i32, i32
  }
  func.func @transform_1(%arg0: i32) -> (i32, i32) {
    %c0_i32 = arith.constant 0 : i32
    %c0_i32_0 = arith.constant 0 : i32
    %c0_i32_1 = arith.constant 0 : i32
    return %c0_i32, %c0_i32_0 : i32, i32
  }
  func.func @transform_2(%arg0: i32) -> (i32, i32) {
    %c0_i32 = arith.constant 0 : i32
    %c0_i32_0 = arith.constant 0 : i32
    %c0_i32_1 = arith.constant 0 : i32
    return %c0_i32, %c0_i32_0 : i32, i32
  }
  func.func @transform_3(%arg0: i32) -> (i32, i32, i32) {
    %c0_i32 = arith.constant 0 : i32
    %c0_i32_0 = arith.constant 0 : i32
    %c0_i32_1 = arith.constant 0 : i32
    %c0_i32_2 = arith.constant 0 : i32
    return %c0_i32, %c0_i32_0, %c0_i32_1 : i32, i32, i32
  }
  func.func @transform_4(%arg0: i32) -> (i32, i32, i32) {
    %c0_i32 = arith.constant 0 : i32
    %c0_i32_0 = arith.constant 0 : i32
    %c0_i32_1 = arith.constant 0 : i32
    %c0_i32_2 = arith.constant 0 : i32
    return %c0_i32, %c0_i32_0, %c0_i32_1 : i32, i32, i32
  }
  func.func @transform_5(%arg0: i32) -> (i32, i32) {
    %c0_i32 = arith.constant 0 : i32
    %c0_i32_0 = arith.constant 0 : i32
    return %arg0, %c0_i32 : i32, i32
  }
}

</mosaic_0001>

<llo_original>
// kernel: tpu_custom_call.1
$region0: #{tpu_custom_call.1}
  #allocation0 [shape = 'u32[]', space=smem, size = 0x4, offset = 0x4, fixed_abs, tag = 'smem constant byte address 0x4 - core index']
  #allocation1 [shape = 'u32[144,128]{1,0:T(1,128)}', space=vmem, size = 0x12000, scoped, tag = 'internal scratch']
  %s0 = inlined_call_operand.hbm [shape: f32[16,128], index: 0, kind: input, shape index: {}]
  %s1 = inlined_call_operand.hbm [shape: f32[128,1536], index: 1, kind: input, shape index: {}]
  %s2 = inlined_call_operand.vmem [shape: f32[1,128], index: 2, kind: input, shape index: {}]
  %s3 = inlined_call_operand.hbm [shape: f32[2,128,256], index: 3, kind: input, shape index: {}]
  %s4 = inlined_call_operand.vmem [shape: f32[2,1,256], index: 4, kind: input, shape index: {}]
  %s5 = inlined_call_operand.hbm [shape: f32[16,128], index: 5, kind: output, shape index: {}]
  %s6 = sld [smem:[#allocation0]]
  $region42: #{tpu_custom_call.1} parent=0
    _
  %s8 = ssub.s32 1, %s6
  %s9 = scalar_select 0, %s8, %s6
  $region1: #{tpu_custom_call.1} parent=0
    #allocation2 [shape = 'u8[8192]{0}', space=vmem, size = 0x2000, scoped, tag = 'input window, operand 0, single buffered']
    #allocation3 [shape = 's32[1]{0}', space=sflag, size = 0x4, scoped, tag = 'scoped memory for tpu_custom_call.1']
    #allocation4 [shape = 's32[1]{0}', space=sflag, size = 0x4, scoped, tag = 'scoped memory for tpu_custom_call.1']
    #allocation5 [shape = 'u8[786432]{0}', space=vmem, size = 0xc0000, scoped, tag = 'input window, operand 1, single buffered']
    #allocation6 [shape = 's32[1]{0}', space=sflag, size = 0x4, scoped, tag = 'scoped memory for tpu_custom_call.1']
    #allocation7 [shape = 'u8[262144]{0}', space=vmem, size = 0x40000, scoped, tag = 'input window, operand 3, single buffered']
    #allocation8 [shape = 'u8[8192]{0}', space=vmem, size = 0x2000, scoped, tag = 'output window, operand 0, single buffered']
    %10 = vsyncpa [#allocation3], 0
    %11 = vsyncpa [#allocation6], 0
    %12 = vsyncpa [#allocation4], 0
    // Predicated region
    $region2: #{tpu_custom_call.1} parent=1 // pred_check
      _
    $region3: #{tpu_custom_call.1} parent=1 // pred_check_branch
      %14 = sbr.rel (0) target = $region5
    $region4: #{tpu_custom_call.1} parent=1 // pred_region
      %s16 = ssub.s32 256, 256
      %17 = vsyncadd [#allocation3], %s16
      %s18 = sshll.u32 [#allocation2], 4
      %s19 = int_to_ptr.vmem [resolvable:$true] %s18
      %24 = dma.hbm_to_vmem [thread:$0]  %s0, 256, %s19, [#allocation3], 128, 128, 8
    $region5: #{tpu_custom_call.1} parent=1 // pred_fallthru
      _
    // Predicated region
    $region6: #{tpu_custom_call.1} parent=1 // pred_check
      _
    $region7: #{tpu_custom_call.1} parent=1 // pred_check_branch
      %26 = sbr.rel (0) target = $region9
    $region8: #{tpu_custom_call.1} parent=1 // pred_region
      %s28 = ssub.s32 24576, 24576
      %29 = vsyncadd [#allocation6], %s28
      %s30 = sshll.u32 [#allocation5], 4
      %s31 = int_to_ptr.vmem [resolvable:$true] %s30
      %36 = dma.hbm_to_vmem [thread:$0]  %s1, 24576, %s31, [#allocation6], 1536, 1536, 96
    $region9: #{tpu_custom_call.1} parent=1 // pred_fallthru
      _
    // Predicated region
    $region10: #{tpu_custom_call.1} parent=1 // pred_check
      _
    $region11: #{tpu_custom_call.1} parent=1 // pred_check_branch
      %38 = sbr.rel (0) target = $region13
    $region12: #{tpu_custom_call.1} parent=1 // pred_region
      _
    $region13: #{tpu_custom_call.1} parent=1 // pred_fallthru
      _
    // Predicated region
    $region14: #{tpu_custom_call.1} parent=1 // pred_check
      _
    $region15: #{tpu_custom_call.1} parent=1 // pred_check_branch
      %40 = sbr.rel (0) target = $region17
    $region16: #{tpu_custom_call.1} parent=1 // pred_region
      %s42 = ssub.s32 8192, 8192
      %43 = vsyncadd [#allocation6], %s42
      %s44 = sshll.u32 [#allocation7], 4
      %s45 = int_to_ptr.vmem [resolvable:$true] %s44
      %50 = dma.hbm_to_vmem [thread:$0]  %s3, 8192, %s45, [#allocation6], 256, 256, 16
    $region17: #{tpu_custom_call.1} parent=1 // pred_fallthru
      _
    // Predicated region
    $region18: #{tpu_custom_call.1} parent=1 // pred_check
      _
    $region19: #{tpu_custom_call.1} parent=1 // pred_check_branch
      %52 = sbr.rel (0) target = $region21
    $region20: #{tpu_custom_call.1} parent=1 // pred_region
      _
    $region21: #{tpu_custom_call.1} parent=1 // pred_fallthru
      _
    // Predicated region
    $region22: #{tpu_custom_call.1} parent=1 // pred_check
      _
    $region23: #{tpu_custom_call.1} parent=1 // pred_check_branch
      %54 = sbr.rel (0) target = $region25
    $region24: #{tpu_custom_call.1} parent=1 // pred_region
      %55 = dma.done [#allocation3], 256
    $region25: #{tpu_custom_call.1} parent=1 // pred_fallthru
      _
    // Predicated region
    $region26: #{tpu_custom_call.1} parent=1 // pred_check
      _
    $region27: #{tpu_custom_call.1} parent=1 // pred_check_branch
      %57 = sbr.rel (0) target = $region29
    $region28: #{tpu_custom_call.1} parent=1 // pred_region
      %58 = dma.done [#allocation6], 24576
    $region29: #{tpu_custom_call.1} parent=1 // pred_fallthru
      _
    // Predicated region
    $region30: #{tpu_custom_call.1} parent=1 // pred_check
      _
    $region31: #{tpu_custom_call.1} parent=1 // pred_check_branch
      %60 = sbr.rel (0) target = $region33
    $region32: #{tpu_custom_call.1} parent=1 // pred_region
      %61 = dma.done [#allocation6], 8192
    $region33: #{tpu_custom_call.1} parent=1 // pred_fallthru
      _
    %v62 = vld [vmem:[#allocation2] sm:$0xff]
    %v63 = vld [vmem:[#allocation2 + $0x8] sm:$0xff]
    %v64 = vld [vmem:[#allocation5] sm:$0xff]
    %v65 = vld [vmem:[#allocation5 + $0x8] sm:$0xff]
    %v66 = vld [vmem:[#allocation5 + $0x10] sm:$0xff]
    %v67 = vld [vmem:[#allocation5 + $0x18] sm:$0xff]
    %v68 = vld [vmem:[#allocation5 + $0x20] sm:$0xff]
    %v69 = vld [vmem:[#allocation5 + $0x28] sm:$0xff]
    %v70 = vld [vmem:[#allocation5 + $0x30] sm:$0xff]
    %v71 = vld [vmem:[#allocation5 + $0x38] sm:$0xff]
    %v72 = vld [vmem:[#allocation5 + $0x40] sm:$0xff]
    %v73 = vld [vmem:[#allocation5 + $0x48] sm:$0xff]
    %v74 = vld [vmem:[#allocation5 + $0x50] sm:$0xff]
    %v75 = vld [vmem:[#allocation5 + $0x58] sm:$0xff]
    %v76 = vld [vmem:[#allocation5 + $0x60] sm:$0xff]
    %v77 = vld [vmem:[#allocation5 + $0x68] sm:$0xff]
    %v78 = vld [vmem:[#allocation5 + $0x70] sm:$0xff]
    %v79 = vld [vmem:[#allocation5 + $0x78] sm:$0xff]
    %v80 = vld [vmem:[#allocation5 + $0x80] sm:$0xff]
    %v81 = vld [vmem:[#allocation5 + $0x88] sm:$0xff]
    %v82 = vld [vmem:[#allocation5 + $0x90] sm:$0xff]
    %v83 = vld [vmem:[#allocation5 + $0x98] sm:$0xff]
    %v84 = vld [vmem:[#allocation5 + $0xa0] sm:$0xff]
    %v85 = vld [vmem:[#allocation5 + $0xa8] sm:$0xff]
    %v86 = vld [vmem:[#allocation5 + $0xb0] sm:$0xff]
    %v87 = vld [vmem:[#allocation5 + $0xb8] sm:$0xff]
    %v88 = vld [vmem:[#allocation5 + $0xc0] sm:$0xff]
    %v89 = vld [vmem:[#allocation5 + $0xc8] sm:$0xff]
    %v90 = vld [vmem:[#allocation5 + $0xd0] sm:$0xff]
    %v91 = vld [vmem:[#allocation5 + $0xd8] sm:$0xff]
    %v92 = vld [vmem:[#allocation5 + $0xe0] sm:$0xff]
    %v93 = vld [vmem:[#allocation5 + $0xe8] sm:$0xff]
    %v94 = vld [vmem:[#allocation5 + $0xf0] sm:$0xff]
    %v95 = vld [vmem:[#allocation5 + $0xf8] sm:$0xff]
    %v96 = vld [vmem:[#allocation5 + $0x100] sm:$0xff]
    %v97 = vld [vmem:[#allocation5 + $0x108] sm:$0xff]
    %v98 = vld [vmem:[#allocation5 + $0x110] sm:$0xff]
    %v99 = vld [vmem:[#allocation5 + $0x118] sm:$0xff]
    %v100 = vld [vmem:[#allocation5 + $0x120] sm:$0xff]
    %v101 = vld [vmem:[#allocation5 + $0x128] sm:$0xff]
    %v102 = vld [vmem:[#allocation5 + $0x130] sm:$0xff]
    %v103 = vld [vmem:[#allocation5 + $0x138] sm:$0xff]
    %v104 = vld [vmem:[#allocation5 + $0x140] sm:$0xff]
    %v105 = vld [vmem:[#allocation5 + $0x148] sm:$0xff]
    %v106 = vld [vmem:[#allocation5 + $0x150] sm:$0xff]
    %v107 = vld [vmem:[#allocation5 + $0x158] sm:$0xff]
    %v108 = vld [vmem:[#allocation5 + $0x160] sm:$0xff]
    %v109 = vld [vmem:[#allocation5 + $0x168] sm:$0xff]
    %v110 = vld [vmem:[#allocation5 + $0x170] sm:$0xff]
    %v111 = vld [vmem:[#allocation5 + $0x178] sm:$0xff]
    %v112 = vld [vmem:[#allocation5 + $0x180] sm:$0xff]
    %v113 = vld [vmem:[#allocation5 + $0x188] sm:$0xff]
    %v114 = vld [vmem:[#allocation5 + $0x190] sm:$0xff]
    %v115 = vld [vmem:[#allocation5 + $0x198] sm:$0xff]
    %v116 = vld [vmem:[#allocation5 + $0x1a0] sm:$0xff]
    %v117 = vld [vmem:[#allocation5 + $0x1a8] sm:$0xff]
    %v118 = vld [vmem:[#allocation5 + $0x1b0] sm:$0xff]
    %v119 = vld [vmem:[#allocation5 + $0x1b8] sm:$0xff]
    %v120 = vld [vmem:[#allocation5 + $0x1c0] sm:$0xff]
    %v121 = vld [vmem:[#allocation5 + $0x1c8] sm:$0xff]
    %v122 = vld [vmem:[#allocation5 + $0x1d0] sm:$0xff]
    %v123 = vld [vmem:[#allocation5 + $0x1d8] sm:$0xff]
    %v124 = vld [vmem:[#allocation5 + $0x1e0] sm:$0xff]
    %v125 = vld [vmem:[#allocation5 + $0x1e8] sm:$0xff]
    %v126 = vld [vmem:[#allocation5 + $0x1f0] sm:$0xff]
    %v127 = vld [vmem:[#allocation5 + $0x1f8] sm:$0xff]
    %v128 = vld [vmem:[#allocation5 + $0x200] sm:$0xff]
    %v129 = vld [vmem:[#allocation5 + $0x208] sm:$0xff]
    %v130 = vld [vmem:[#allocation5 + $0x210] sm:$0xff]
    %v131 = vld [vmem:[#allocation5 + $0x218] sm:$0xff]
    %v132 = vld [vmem:[#allocation5 + $0x220] sm:$0xff]
    %v133 = vld [vmem:[#allocation5 + $0x228] sm:$0xff]
    %v134 = vld [vmem:[#allocation5 + $0x230] sm:$0xff]
    %v135 = vld [vmem:[#allocation5 + $0x238] sm:$0xff]
    %v136 = vld [vmem:[#allocation5 + $0x240] sm:$0xff]
    %v137 = vld [vmem:[#allocation5 + $0x248] sm:$0xff]
    %v138 = vld [vmem:[#allocation5 + $0x250] sm:$0xff]
    %v139 = vld [vmem:[#allocation5 + $0x258] sm:$0xff]
    %v140 = vld [vmem:[#allocation5 + $0x260] sm:$0xff]
    %v141 = vld [vmem:[#allocation5 + $0x268] sm:$0xff]
    %v142 = vld [vmem:[#allocation5 + $0x270] sm:$0xff]
    %v143 = vld [vmem:[#allocation5 + $0x278] sm:$0xff]
    %v144 = vld [vmem:[#allocation5 + $0x280] sm:$0xff]
    %v145 = vld [vmem:[#allocation5 + $0x288] sm:$0xff]
    %v146 = vld [vmem:[#allocation5 + $0x290] sm:$0xff]
    %v147 = vld [vmem:[#allocation5 + $0x298] sm:$0xff]
    %v148 = vld [vmem:[#allocation5 + $0x2a0] sm:$0xff]
    %v149 = vld [vmem:[#allocation5 + $0x2a8] sm:$0xff]
    %v150 = vld [vmem:[#allocation5 + $0x2b0] sm:$0xff]
    %v151 = vld [vmem:[#allocation5 + $0x2b8] sm:$0xff]
    %v152 = vld [vmem:[#allocation5 + $0x2c0] sm:$0xff]
    %v153 = vld [vmem:[#allocation5 + $0x2c8] sm:$0xff]
    %v154 = vld [vmem:[#allocation5 + $0x2d0] sm:$0xff]
    %v155 = vld [vmem:[#allocation5 + $0x2d8] sm:$0xff]
    %v156 = vld [vmem:[#allocation5 + $0x2e0] sm:$0xff]
    %v157 = vld [vmem:[#allocation5 + $0x2e8] sm:$0xff]
    %v158 = vld [vmem:[#allocation5 + $0x2f0] sm:$0xff]
    %v159 = vld [vmem:[#allocation5 + $0x2f8] sm:$0xff]
    %v160 = vld [vmem:[#allocation5 + $0x300] sm:$0xff]
    %v161 = vld [vmem:[#allocation5 + $0x308] sm:$0xff]
    %v162 = vld [vmem:[#allocation5 + $0x310] sm:$0xff]
    %v163 = vld [vmem:[#allocation5 + $0x318] sm:$0xff]
    %v164 = vld [vmem:[#allocation5 + $0x320] sm:$0xff]
    %v165 = vld [vmem:[#allocation5 + $0x328] sm:$0xff]
    %v166 = vld [vmem:[#allocation5 + $0x330] sm:$0xff]
    %v167 = vld [vmem:[#allocation5 + $0x338] sm:$0xff]
    %v168 = vld [vmem:[#allocation5 + $0x340] sm:$0xff]
    %v169 = vld [vmem:[#allocation5 + $0x348] sm:$0xff]
    %v170 = vld [vmem:[#allocation5 + $0x350] sm:$0xff]
    %v171 = vld [vmem:[#allocation5 + $0x358] sm:$0xff]
    %v172 = vld [vmem:[#allocation5 + $0x360] sm:$0xff]
    %v173 = vld [vmem:[#allocation5 + $0x368] sm:$0xff]
    %v174 = vld [vmem:[#allocation5 + $0x370] sm:$0xff]
    %v175 = vld [vmem:[#allocation5 + $0x378] sm:$0xff]
    %v176 = vld [vmem:[#allocation5 + $0x380] sm:$0xff]
    %v177 = vld [vmem:[#allocation5 + $0x388] sm:$0xff]
    %v178 = vld [vmem:[#allocation5 + $0x390] sm:$0xff]
    %v179 = vld [vmem:[#allocation5 + $0x398] sm:$0xff]
    %v180 = vld [vmem:[#allocation5 + $0x3a0] sm:$0xff]
    %v181 = vld [vmem:[#allocation5 + $0x3a8] sm:$0xff]
    %v182 = vld [vmem:[#allocation5 + $0x3b0] sm:$0xff]
    %v183 = vld [vmem:[#allocation5 + $0x3b8] sm:$0xff]
    %v184 = vld [vmem:[#allocation5 + $0x3c0] sm:$0xff]
    %v185 = vld [vmem:[#allocation5 + $0x3c8] sm:$0xff]
    %v186 = vld [vmem:[#allocation5 + $0x3d0] sm:$0xff]
    %v187 = vld [vmem:[#allocation5 + $0x3d8] sm:$0xff]
    %v188 = vld [vmem:[#allocation5 + $0x3e0] sm:$0xff]
    %v189 = vld [vmem:[#allocation5 + $0x3e8] sm:$0xff]
    %v190 = vld [vmem:[#allocation5 + $0x3f0] sm:$0xff]
    %v191 = vld [vmem:[#allocation5 + $0x3f8] sm:$0xff]
    %v192 = vld [vmem:[#allocation5 + $0x400] sm:$0xff]
    %v193 = vld [vmem:[#allocation5 + $0x408] sm:$0xff]
    %v194 = vld [vmem:[#allocation5 + $0x410] sm:$0xff]
    %v195 = vld [vmem:[#allocation5 + $0x418] sm:$0xff]
    %v196 = vld [vmem:[#allocation5 + $0x420] sm:$0xff]
    %v197 = vld [vmem:[#allocation5 + $0x428] sm:$0xff]
    %v198 = vld [vmem:[#allocation5 + $0x430] sm:$0xff]
    %v199 = vld [vmem:[#allocation5 + $0x438] sm:$0xff]
    %v200 = vld [vmem:[#allocation5 + $0x440] sm:$0xff]
    %v201 = vld [vmem:[#allocation5 + $0x448] sm:$0xff]
    %v202 = vld [vmem:[#allocation5 + $0x450] sm:$0xff]
    %v203 = vld [vmem:[#allocation5 + $0x458] sm:$0xff]
    %v204 = vld [vmem:[#allocation5 + $0x460] sm:$0xff]
    %v205 = vld [vmem:[#allocation5 + $0x468] sm:$0xff]
    %v206 = vld [vmem:[#allocation5 + $0x470] sm:$0xff]
    %v207 = vld [vmem:[#allocation5 + $0x478] sm:$0xff]
    %v208 = vld [vmem:[#allocation5 + $0x480] sm:$0xff]
    %v209 = vld [vmem:[#allocation5 + $0x488] sm:$0xff]
    %v210 = vld [vmem:[#allocation5 + $0x490] sm:$0xff]
    %v211 = vld [vmem:[#allocation5 + $0x498] sm:$0xff]
    %v212 = vld [vmem:[#allocation5 + $0x4a0] sm:$0xff]
    %v213 = vld [vmem:[#allocation5 + $0x4a8] sm:$0xff]
    %v214 = vld [vmem:[#allocation5 + $0x4b0] sm:$0xff]
    %v215 = vld [vmem:[#allocation5 + $0x4b8] sm:$0xff]
    %v216 = vld [vmem:[#allocation5 + $0x4c0] sm:$0xff]
    %v217 = vld [vmem:[#allocation5 + $0x4c8] sm:$0xff]
    %v218 = vld [vmem:[#allocation5 + $0x4d0] sm:$0xff]
    %v219 = vld [vmem:[#allocation5 + $0x4d8] sm:$0xff]
    %v220 = vld [vmem:[#allocation5 + $0x4e0] sm:$0xff]
    %v221 = vld [vmem:[#allocation5 + $0x4e8] sm:$0xff]
    %v222 = vld [vmem:[#allocation5 + $0x4f0] sm:$0xff]
    %v223 = vld [vmem:[#allocation5 + $0x4f8] sm:$0xff]
    %v224 = vld [vmem:[#allocation5 + $0x500] sm:$0xff]
    %v225 = vld [vmem:[#allocation5 + $0x508] sm:$0xff]
    %v226 = vld [vmem:[#allocation5 + $0x510] sm:$0xff]
    %v227 = vld [vmem:[#allocation5 + $0x518] sm:$0xff]
    %v228 = vld [vmem:[#allocation5 + $0x520] sm:$0xff]
    %v229 = vld [vmem:[#allocation5 + $0x528] sm:$0xff]
    %v230 = vld [vmem:[#allocation5 + $0x530] sm:$0xff]
    %v231 = vld [vmem:[#allocation5 + $0x538] sm:$0xff]
    %v232 = vld [vmem:[#allocation5 + $0x540] sm:$0xff]
    %v233 = vld [vmem:[#allocation5 + $0x548] sm:$0xff]
    %v234 = vld [vmem:[#allocation5 + $0x550] sm:$0xff]
    %v235 = vld [vmem:[#allocation5 + $0x558] sm:$0xff]
    %v236 = vld [vmem:[#allocation5 + $0x560] sm:$0xff]
    %v237 = vld [vmem:[#allocation5 + $0x568] sm:$0xff]
    %v238 = vld [vmem:[#allocation5 + $0x570] sm:$0xff]
    %v239 = vld [vmem:[#allocation5 + $0x578] sm:$0xff]
    %v240 = vld [vmem:[#allocation5 + $0x580] sm:$0xff]
    %v241 = vld [vmem:[#allocation5 + $0x588] sm:$0xff]
    %v242 = vld [vmem:[#allocation5 + $0x590] sm:$0xff]
    %v243 = vld [vmem:[#allocation5 + $0x598] sm:$0xff]
    %v244 = vld [vmem:[#allocation5 + $0x5a0] sm:$0xff]
    %v245 = vld [vmem:[#allocation5 + $0x5a8] sm:$0xff]
    %v246 = vld [vmem:[#allocation5 + $0x5b0] sm:$0xff]
    %v247 = vld [vmem:[#allocation5 + $0x5b8] sm:$0xff]
    %v248 = vld [vmem:[#allocation5 + $0x5c0] sm:$0xff]
    %v249 = vld [vmem:[#allocation5 + $0x5c8] sm:$0xff]
    %v250 = vld [vmem:[#allocation5 + $0x5d0] sm:$0xff]
    %v251 = vld [vmem:[#allocation5 + $0x5d8] sm:$0xff]
    %v252 = vld [vmem:[#allocation5 + $0x5e0] sm:$0xff]
    %v253 = vld [vmem:[#allocation5 + $0x5e8] sm:$0xff]
    %v254 = vld [vmem:[#allocation5 + $0x5f0] sm:$0xff]
    %v255 = vld [vmem:[#allocation5 + $0x5f8] sm:$0xff]
    %256 = vmatprep.subr.mxu0 %v65
    %257 = vmatpush1.msra.mxu0 %v64
    %258 = vmatprep.subr.mxu0 %v77
    %259 = vmatpush1.msra.mxu0 %v76
    %260 = vmatprep.subr.mxu0 %v89
    %261 = vmatpush1.msra.mxu0 %v88
    %262 = vmatprep.subr.mxu0 %v101
    %263 = vmatpush1.msra.mxu0 %v100
    %264 = vmatprep.subr.mxu0 %v113
    %265 = vmatpush1.msra.mxu0 %v112
    %266 = vmatprep.subr.mxu0 %v125
    %267 = vmatpush1.msra.mxu0 %v124
    %268 = vmatprep.subr.mxu0 %v137
    %269 = vmatpush1.msra.mxu0 %v136
    %270 = vmatprep.subr.mxu0 %v149
    %271 = vmatpush1.msra.mxu0 %v148
    %272 = vmatprep.subr.mxu0 %v161
    %273 = vmatpush1.msra.mxu0 %v160
    %274 = vmatprep.subr.mxu0 %v173
    %275 = vmatpush1.msra.mxu0 %v172
    %276 = vmatprep.subr.mxu0 %v185
    %277 = vmatpush1.msra.mxu0 %v184
    %278 = vmatprep.subr.mxu0 %v197
    %279 = vmatpush1.msra.mxu0 %v196
    %280 = vmatprep.subr.mxu0 %v209
    %281 = vmatpush1.msra.mxu0 %v208
    %282 = vmatprep.subr.mxu0 %v221
    %283 = vmatpush1.msra.mxu0 %v220
    %284 = vmatprep.subr.mxu0 %v233
    %285 = vmatpush1.msra.mxu0 %v232
    %286 = vmatprep.subr.mxu0 %v245
    %287 = vmatpush1.msra.mxu0 %v244
    %288 = vmatprep.subr.mxu0 0.0
    %289 = vmatpush1.msra.mxu0 0.0
    %290 = vmatprep.subr.mxu0 0.0
    %291 = vmatpush1.msra.mxu0 0.0
    %292 = vmatprep.subr.mxu0 0.0
    %293 = vmatpush1.msra.mxu0 0.0
    %294 = vmatprep.subr.mxu0 0.0
    %295 = vmatpush1.msra.mxu0 0.0
    %296 = vmatprep.subr.mxu0 0.0
    %297 = vmatpush1.msra.mxu0 0.0
    %298 = vmatprep.subr.mxu0 0.0
    %299 = vmatpush1.msra.mxu0 0.0
    %300 = vmatprep.subr.mxu0 0.0
    %301 = vmatpush1.msra.mxu0 0.0
    %302 = vmatprep.subr.mxu0 0.0
    %303 = vmatpush1.msra.mxu0 0.0
    %304 = vmatprep.subr.mxu0 0.0
    %305 = vmatpush1.msra.mxu0 0.0
    %306 = vmatprep.subr.mxu0 0.0
    %307 = vmatpush1.msra.mxu0 0.0
    %308 = vmatprep.subr.mxu0 0.0
    %309 = vmatpush1.msra.mxu0 0.0
    %310 = vmatprep.subr.mxu0 0.0
    %311 = vmatpush1.msra.mxu0 0.0
    %312 = vmatprep.subr.mxu0 0.0
    %313 = vmatpush1.msra.mxu0 0.0
    %314 = vmatprep.subr.mxu0 0.0
    %315 = vmatpush1.msra.mxu0 0.0
    %316 = vmatprep.subr.mxu0 0.0
    %317 = vmatpush1.msra.mxu0 0.0
    %318 = vmatprep.subr.mxu0 0.0
    %319 = vmatpush1.msra.mxu0 0.0
    %320 = vmatprep.mubr.f32.mxu0 0.0
    %321 = vmatmul.mubr.f32.gmra.mrb[0].mxu0 %v62
    %v322 = vpop.f32.mrb[0].mxu0
    %v323 = vadd.f32 0.0, %v322
    %v324 = vpop.f32.mrb[0].mxu0
    %v325 = vadd.f32 0.0, %v324
    %326 = vmatprep.mubr.f32.mxu0 0.0
    %327 = vmatmul.mubr.f32.gmra.mrb[0].mxu0 %v63
    %v328 = vpop.f32.mrb[0].mxu0
    %v329 = vadd.f32 0.0, %v328
    %v330 = vpop.f32.mrb[0].mxu0
    %v331 = vadd.f32 0.0, %v330
    %332 = vdwg.mxu0
    %333 = vmatprep.subr.mxu0 %v67
    %334 = vmatpush1.msra.mxu0 %v66
    %335 = vmatprep.subr.mxu0 %v79
    %336 = vmatpush1.msra.mxu0 %v78
    %337 = vmatprep.subr.mxu0 %v91
    %338 = vmatpush1.msra.mxu0 %v90
    %339 = vmatprep.subr.mxu0 %v103
    %340 = vmatpush1.msra.mxu0 %v102
    %341 = vmatprep.subr.mxu0 %v115
    %342 = vmatpush1.msra.mxu0 %v114
    %343 = vmatprep.subr.mxu0 %v127
    %344 = vmatpush1.msra.mxu0 %v126
    %345 = vmatprep.subr.mxu0 %v139
    %346 = vmatpush1.msra.mxu0 %v138
    %347 = vmatprep.subr.mxu0 %v151
    %348 = vmatpush1.msra.mxu0 %v150
    %349 = vmatprep.subr.mxu0 %v163
    %350 = vmatpush1.msra.mxu0 %v162
    %351 = vmatprep.subr.mxu0 %v175
    %352 = vmatpush1.msra.mxu0 %v174
    %353 = vmatprep.subr.mxu0 %v187
    %354 = vmatpush1.msra.mxu0 %v186
    %355 = vmatprep.subr.mxu0 %v199
    %356 = vmatpush1.msra.mxu0 %v198
    %357 = vmatprep.subr.mxu0 %v211
    %358 = vmatpush1.msra.mxu0 %v210
    %359 = vmatprep.subr.mxu0 %v223
    %360 = vmatpush1.msra.mxu0 %v222
    %361 = vmatprep.subr.mxu0 %v235
    %362 = vmatpush1.msra.mxu0 %v234
    %363 = vmatprep.subr.mxu0 %v247
    %364 = vmatpush1.msra.mxu0 %v246
    %365 = vmatprep.subr.mxu0 0.0
    %366 = vmatpush1.msra.mxu0 0.0
    %367 = vmatprep.subr.mxu0 0.0
    %368 = vmatpush1.msra.mxu0 0.0
    %369 = vmatprep.subr.mxu0 0.0
    %370 = vmatpush1.msra.mxu0 0.0
    %371 = vmatprep.subr.mxu0 0.0
    %372 = vmatpush1.msra.mxu0 0.0
    %373 = vmatprep.subr.mxu0 0.0
    %374 = vmatpush1.msra.mxu0 0.0
    %375 = vmatprep.subr.mxu0 0.0
    %376 = vmatpush1.msra.mxu0 0.0
    %377 = vmatprep.subr.mxu0 0.0
    %378 = vmatpush1.msra.mxu0 0.0
    %379 = vmatprep.subr.mxu0 0.0
    %380 = vmatpush1.msra.mxu0 0.0
    %381 = vmatprep.subr.mxu0 0.0
    %382 = vmatpush1.msra.mxu0 0.0
    %383 = vmatprep.subr.mxu0 0.0
    %384 = vmatpush1.msra.mxu0 0.0
    %385 = vmatprep.subr.mxu0 0.0
    %386 = vmatpush1.msra.mxu0 0.0
    %387 = vmatprep.subr.mxu0 0.0
    %388 = vmatpush1.msra.mxu0 0.0
    %389 = vmatprep.subr.mxu0 0.0
    %390 = vmatpush1.msra.mxu0 0.0
    %391 = vmatprep.subr.mxu0 0.0
    %392 = vmatpush1.msra.mxu0 0.0
    %393 = vmatprep.subr.mxu0 0.0
    %394 = vmatpush1.msra.mxu0 0.0
    %395 = vmatprep.subr.mxu0 0.0
    %396 = vmatpush1.msra.mxu0 0.0
    %397 = vmatprep.mubr.f32.mxu0 0.0
    %398 = vmatmul.mubr.f32.gmra.mrb[0].mxu0 %v62
    %v399 = vpop.f32.mrb[0].mxu0
    %v400 = vadd.f32 0.0, %v399
    %v401 = vpop.f32.mrb[0].mxu0
    %v402 = vadd.f32 0.0, %v401
    %403 = vmatprep.mubr.f32.mxu0 0.0
    %404 = vmatmul.mubr.f32.gmra.mrb[0].mxu0 %v63
    %v405 = vpop.f32.mrb[0].mxu0
    %v406 = vadd.f32 0.0, %v405
    %v407 = vpop.f32.mrb[0].mxu0
    %v408 = vadd.f32 0.0, %v407
    %409 = vdwg.mxu0
    %410 = vmatprep.subr.mxu0 %v69
    %411 = vmatpush1.msra.mxu0 %v68
    %412 = vmatprep.subr.mxu0 %v81
    %413 = vmatpush1.msra.mxu0 %v80
    %414 = vmatprep.subr.mxu0 %v93
    %415 = vmatpush1.msra.mxu0 %v92
    %416 = vmatprep.subr.mxu0 %v105
    %417 = vmatpush1.msra.mxu0 %v104
    %418 = vmatprep.subr.mxu0 %v117
    %419 = vmatpush1.msra.mxu0 %v116
    %420 = vmatprep.subr.mxu0 %v129
    %421 = vmatpush1.msra.mxu0 %v128
    %422 = vmatprep.subr.mxu0 %v141
    %423 = vmatpush1.msra.mxu0 %v140
    %424 = vmatprep.subr.mxu0 %v153
    %425 = vmatpush1.msra.mxu0 %v152
    %426 = vmatprep.subr.mxu0 %v165
    %427 = vmatpush1.msra.mxu0 %v164
    %428 = vmatprep.subr.mxu0 %v177
    %429 = vmatpush1.msra.mxu0 %v176
    %430 = vmatprep.subr.mxu0 %v189
    %431 = vmatpush1.msra.mxu0 %v188
    %432 = vmatprep.subr.mxu0 %v201
    %433 = vmatpush1.msra.mxu0 %v200
    %434 = vmatprep.subr.mxu0 %v213
    %435 = vmatpush1.msra.mxu0 %v212
    %436 = vmatprep.subr.mxu0 %v225
    %437 = vmatpush1.msra.mxu0 %v224
    %438 = vmatprep.subr.mxu0 %v237
    %439 = vmatpush1.msra.mxu0 %v236
    %440 = vmatprep.subr.mxu0 %v249
    %441 = vmatpush1.msra.mxu0 %v248
    %442 = vmatprep.subr.mxu0 0.0
    %443 = vmatpush1.msra.mxu0 0.0
    %444 = vmatprep.subr.mxu0 0.0
    %445 = vmatpush1.msra.mxu0 0.0
    %446 = vmatprep.subr.mxu0 0.0
    %447 = vmatpush1.msra.mxu0 0.0
    %448 = vmatprep.subr.mxu0 0.0
    %449 = vmatpush1.msra.mxu0 0.0
    %450 = vmatprep.subr.mxu0 0.0
    %451 = vmatpush1.msra.mxu0 0.0
    %452 = vmatprep.subr.mxu0 0.0
    %453 = vmatpush1.msra.mxu0 0.0
    %454 = vmatprep.subr.mxu0 0.0
    %455 = vmatpush1.msra.mxu0 0.0
    %456 = vmatprep.subr.mxu0 0.0
    %457 = vmatpush1.msra.mxu0 0.0
    %458 = vmatprep.subr.mxu0 0.0
    %459 = vmatpush1.msra.mxu0 0.0
    %460 = vmatprep.subr.mxu0 0.0
    %461 = vmatpush1.msra.mxu0 0.0
    %462 = vmatprep.subr.mxu0 0.0
    %463 = vmatpush1.msra.mxu0 0.0
    %464 = vmatprep.subr.mxu0 0.0
    %465 = vmatpush1.msra.mxu0 0.0
    %466 = vmatprep.subr.mxu0 0.0
    %467 = vmatpush1.msra.mxu0 0.0
    %468 = vmatprep.subr.mxu0 0.0
    %469 = vmatpush1.msra.mxu0 0.0
    %470 = vmatprep.subr.mxu0 0.0
    %471 = vmatpush1.msra.mxu0 0.0
    %472 = vmatprep.subr.mxu0 0.0
    %473 = vmatpush1.msra.mxu0 0.0
    %474 = vmatprep.mubr.f32.mxu0 0.0
    %475 = vmatmul.mubr.f32.gmra.mrb[0].mxu0 %v62
    %v476 = vpop.f32.mrb[0].mxu0
    %v477 = vadd.f32 0.0, %v476
    %v478 = vpop.f32.mrb[0].mxu0
    %v479 = vadd.f32 0.0, %v478
    %480 = vmatprep.mubr.f32.mxu0 0.0
    %481 = vmatmul.mubr.f32.gmra.mrb[0].mxu0 %v63
    %v482 = vpop.f32.mrb[0].mxu0
    %v483 = vadd.f32 0.0, %v482
    %v484 = vpop.f32.mrb[0].mxu0
    %v485 = vadd.f32 0.0, %v484
    %486 = vdwg.mxu0
    %487 = vmatprep.subr.mxu0 %v71
    %488 = vmatpush1.msra.mxu0 %v70
    %489 = vmatprep.subr.mxu0 %v83
    %490 = vmatpush1.msra.mxu0 %v82
    %491 = vmatprep.subr.mxu0 %v95
    %492 = vmatpush1.msra.mxu0 %v94
    %493 = vmatprep.subr.mxu0 %v107
    %494 = vmatpush1.msra.mxu0 %v106
    %495 = vmatprep.subr.mxu0 %v119
    %496 = vmatpush1.msra.mxu0 %v118
    %497 = vmatprep.subr.mxu0 %v131
    %498 = vmatpush1.msra.mxu0 %v130
    %499 = vmatprep.subr.mxu0 %v143
    %500 = vmatpush1.msra.mxu0 %v142
    %501 = vmatprep.subr.mxu0 %v155
    %502 = vmatpush1.msra.mxu0 %v154
    %503 = vmatprep.subr.mxu0 %v167
    %504 = vmatpush1.msra.mxu0 %v166
    %505 = vmatprep.subr.mxu0 %v179
    %506 = vmatpush1.msra.mxu0 %v178
    %507 = vmatprep.subr.mxu0 %v191
    %508 = vmatpush1.msra.mxu0 %v190
    %509 = vmatprep.subr.mxu0 %v203
    %510 = vmatpush1.msra.mxu0 %v202
    %511 = vmatprep.subr.mxu0 %v215
    %512 = vmatpush1.msra.mxu0 %v214
    %513 = vmatprep.subr.mxu0 %v227
    %514 = vmatpush1.msra.mxu0 %v226
    %515 = vmatprep.subr.mxu0 %v239
    %516 = vmatpush1.msra.mxu0 %v238
    %517 = vmatprep.subr.mxu0 %v251
    %518 = vmatpush1.msra.mxu0 %v250
    %519 = vmatprep.subr.mxu0 0.0
    %520 = vmatpush1.msra.mxu0 0.0
    %521 = vmatprep.subr.mxu0 0.0
    %522 = vmatpush1.msra.mxu0 0.0
    %523 = vmatprep.subr.mxu0 0.0
    %524 = vmatpush1.msra.mxu0 0.0
    %525 = vmatprep.subr.mxu0 0.0
    %526 = vmatpush1.msra.mxu0 0.0
    %527 = vmatprep.subr.mxu0 0.0
    %528 = vmatpush1.msra.mxu0 0.0
    %529 = vmatprep.subr.mxu0 0.0
    %530 = vmatpush1.msra.mxu0 0.0
    %531 = vmatprep.subr.mxu0 0.0
    %532 = vmatpush1.msra.mxu0 0.0
    %533 = vmatprep.subr.mxu0 0.0
    %534 = vmatpush1.msra.mxu0 0.0
    %535 = vmatprep.subr.mxu0 0.0
    %536 = vmatpush1.msra.mxu0 0.0
    %537 = vmatprep.subr.mxu0 0.0
    %538 = vmatpush1.msra.mxu0 0.0
    %539 = vmatprep.subr.mxu0 0.0
    %540 = vmatpush1.msra.mxu0 0.0
    %541 = vmatprep.subr.mxu0 0.0
    %542 = vmatpush1.msra.mxu0 0.0
    %543 = vmatprep.subr.mxu0 0.0
    %544 = vmatpush1.msra.mxu0 0.0
    %545 = vmatprep.subr.mxu0 0.0
    %546 = vmatpush1.msra.mxu0 0.0
    %547 = vmatprep.subr.mxu0 0.0
    %548 = vmatpush1.msra.mxu0 0.0
    %549 = vmatprep.subr.mxu0 0.0
    %550 = vmatpush1.msra.mxu0 0.0
    %551 = vmatprep.mubr.f32.mxu0 0.0
    %552 = vmatmul.mubr.f32.gmra.mrb[0].mxu0 %v62
    %v553 = vpop.f32.mrb[0].mxu0
    %v554 = vadd.f32 0.0, %v553
    %v555 = vpop.f32.mrb[0].mxu0
    %v556 = vadd.f32 0.0, %v555
    %557 = vmatprep.mubr.f32.mxu0 0.0
    %558 = vmatmul.mubr.f32.gmra.mrb[0].mxu0 %v63
    %v559 = vpop.f32.mrb[0].mxu0
    %v560 = vadd.f32 0.0, %v559
    %v561 = vpop.f32.mrb[0].mxu0
    %v562 = vadd.f32 0.0, %v561
    %563 = vdwg.mxu0
    %564 = vmatprep.subr.mxu0 %v73
    %565 = vmatpush1.msra.mxu0 %v72
    %566 = vmatprep.subr.mxu0 %v85
    %567 = vmatpush1.msra.mxu0 %v84
    %568 = vmatprep.subr.mxu0 %v97
    %569 = vmatpush1.msra.mxu0 %v96
    %570 = vmatprep.subr.mxu0 %v109
    %571 = vmatpush1.msra.mxu0 %v108
    %572 = vmatprep.subr.mxu0 %v121
    %573 = vmatpush1.msra.mxu0 %v120
    %574 = vmatprep.subr.mxu0 %v133
    %575 = vmatpush1.msra.mxu0 %v132
    %576 = vmatprep.subr.mxu0 %v145
    %577 = vmatpush1.msra.mxu0 %v144
    %578 = vmatprep.subr.mxu0 %v157
    %579 = vmatpush1.msra.mxu0 %v156
    %580 = vmatprep.subr.mxu0 %v169
    %581 = vmatpush1.msra.mxu0 %v168
    %582 = vmatprep.subr.mxu0 %v181
    %583 = vmatpush1.msra.mxu0 %v180
    %584 = vmatprep.subr.mxu0 %v193
    %585 = vmatpush1.msra.mxu0 %v192
    %586 = vmatprep.subr.mxu0 %v205
    %587 = vmatpush1.msra.mxu0 %v204
    %588 = vmatprep.subr.mxu0 %v217
    %589 = vmatpush1.msra.mxu0 %v216
    %590 = vmatprep.subr.mxu0 %v229
    %591 = vmatpush1.msra.mxu0 %v228
    %592 = vmatprep.subr.mxu0 %v241
    %593 = vmatpush1.msra.mxu0 %v240
    %594 = vmatprep.subr.mxu0 %v253
    %595 = vmatpush1.msra.mxu0 %v252
    %596 = vmatprep.subr.mxu0 0.0
    %597 = vmatpush1.msra.mxu0 0.0
    %598 = vmatprep.subr.mxu0 0.0
    %599 = vmatpush1.msra.mxu0 0.0
    %600 = vmatprep.subr.mxu0 0.0
    %601 = vmatpush1.msra.mxu0 0.0
    %602 = vmatprep.subr.mxu0 0.0
    %603 = vmatpush1.msra.mxu0 0.0
    %604 = vmatprep.subr.mxu0 0.0
    %605 = vmatpush1.msra.mxu0 0.0
    %606 = vmatprep.subr.mxu0 0.0
    %607 = vmatpush1.msra.mxu0 0.0
    %608 = vmatprep.subr.mxu0 0.0
    %609 = vmatpush1.msra.mxu0 0.0
    %610 = vmatprep.subr.mxu0 0.0
    %611 = vmatpush1.msra.mxu0 0.0
    %612 = vmatprep.subr.mxu0 0.0
    %613 = vmatpush1.msra.mxu0 0.0
    %614 = vmatprep.subr.mxu0 0.0
    %615 = vmatpush1.msra.mxu0 0.0
    %616 = vmatprep.subr.mxu0 0.0
    %617 = vmatpush1.msra.mxu0 0.0
    %618 = vmatprep.subr.mxu0 0.0
    %619 = vmatpush1.msra.mxu0 0.0
    %620 = vmatprep.subr.mxu0 0.0
    %621 = vmatpush1.msra.mxu0 0.0
    %622 = vmatprep.subr.mxu0 0.0
    %623 = vmatpush1.msra.mxu0 0.0
    %624 = vmatprep.subr.mxu0 0.0
    %625 = vmatpush1.msra.mxu0 0.0
    %626 = vmatprep.subr.mxu0 0.0
    %627 = vmatpush1.msra.mxu0 0.0
    %628 = vmatprep.mubr.f32.mxu0 0.0
    %629 = vmatmul.mubr.f32.gmra.mrb[0].mxu0 %v62
    %v630 = vpop.f32.mrb[0].mxu0
    %v631 = vadd.f32 0.0, %v630
    %v632 = vpop.f32.mrb[0].mxu0
    %v633 = vadd.f32 0.0, %v632
    %634 = vmatprep.mubr.f32.mxu0 0.0
    %635 = vmatmul.mubr.f32.gmra.mrb[0].mxu0 %v63
    %v636 = vpop.f32.mrb[0].mxu0
    %v637 = vadd.f32 0.0, %v636
    %v638 = vpop.f32.mrb[0].mxu0
    %v639 = vadd.f32 0.0, %v638
    %640 = vdwg.mxu0
    %641 = vmatprep.subr.mxu0 %v75
    %642 = vmatpush1.msra.mxu0 %v74
    %643 = vmatprep.subr.mxu0 %v87
    %644 = vmatpush1.msra.mxu0 %v86
    %645 = vmatprep.subr.mxu0 %v99
    %646 = vmatpush1.msra.mxu0 %v98
    %647 = vmatprep.subr.mxu0 %v111
    %648 = vmatpush1.msra.mxu0 %v110
    %649 = vmatprep.subr.mxu0 %v123
    %650 = vmatpush1.msra.mxu0 %v122
    %651 = vmatprep.subr.mxu0 %v135
    %652 = vmatpush1.msra.mxu0 %v134
    %653 = vmatprep.subr.mxu0 %v147
    %654 = vmatpush1.msra.mxu0 %v146
    %655 = vmatprep.subr.mxu0 %v159
    %656 = vmatpush1.msra.mxu0 %v158
    %657 = vmatprep.subr.mxu0 %v171
    %658 = vmatpush1.msra.mxu0 %v170
    %659 = vmatprep.subr.mxu0 %v183
    %660 = vmatpush1.msra.mxu0 %v182
    %661 = vmatprep.subr.mxu0 %v195
    %662 = vmatpush1.msra.mxu0 %v194
    %663 = vmatprep.subr.mxu0 %v207
    %664 = vmatpush1.msra.mxu0 %v206
    %665 = vmatprep.subr.mxu0 %v219
    %666 = vmatpush1.msra.mxu0 %v218
    %667 = vmatprep.subr.mxu0 %v231
    %668 = vmatpush1.msra.mxu0 %v230
    %669 = vmatprep.subr.mxu0 %v243
    %670 = vmatpush1.msra.mxu0 %v242
    %671 = vmatprep.subr.mxu0 %v255
    %672 = vmatpush1.msra.mxu0 %v254
    %673 = vmatprep.subr.mxu0 0.0
    %674 = vmatpush1.msra.mxu0 0.0
    %675 = vmatprep.subr.mxu0 0.0
    %676 = vmatpush1.msra.mxu0 0.0
    %677 = vmatprep.subr.mxu0 0.0
    %678 = vmatpush1.msra.mxu0 0.0
    %679 = vmatprep.subr.mxu0 0.0
    %680 = vmatpush1.msra.mxu0 0.0
    %681 = vmatprep.subr.mxu0 0.0
    %682 = vmatpush1.msra.mxu0 0.0
    %683 = vmatprep.subr.mxu0 0.0
    %684 = vmatpush1.msra.mxu0 0.0
    %685 = vmatprep.subr.mxu0 0.0
    %686 = vmatpush1.msra.mxu0 0.0
    %687 = vmatprep.subr.mxu0 0.0
    %688 = vmatpush1.msra.mxu0 0.0
    %689 = vmatprep.subr.mxu0 0.0
    %690 = vmatpush1.msra.mxu0 0.0
    %691 = vmatprep.subr.mxu0 0.0
    %692 = vmatpush1.msra.mxu0 0.0
    %693 = vmatprep.subr.mxu0 0.0
    %694 = vmatpush1.msra.mxu0 0.0
    %695 = vmatprep.subr.mxu0 0.0
    %696 = vmatpush1.msra.mxu0 0.0
    %697 = vmatprep.subr.mxu0 0.0
    %698 = vmatpush1.msra.mxu0 0.0
    %699 = vmatprep.subr.mxu0 0.0
    %700 = vmatpush1.msra.mxu0 0.0
    %701 = vmatprep.subr.mxu0 0.0
    %702 = vmatpush1.msra.mxu0 0.0
    %703 = vmatprep.subr.mxu0 0.0
    %704 = vmatpush1.msra.mxu0 0.0
    %705 = vmatprep.mubr.f32.mxu0 0.0
    %706 = vmatmul.mubr.f32.gmra.mrb[0].mxu0 %v62
    %v707 = vpop.f32.mrb[0].mxu0
    %v708 = vadd.f32 0.0, %v707
    %v709 = vpop.f32.mrb[0].mxu0
    %v710 = vadd.f32 0.0, %v709
    %711 = vmatprep.mubr.f32.mxu0 0.0
    %712 = vmatmul.mubr.f32.gmra.mrb[0].mxu0 %v63
    %v713 = vpop.f32.mrb[0].mxu0
    %v714 = vadd.f32 0.0, %v713
    %v715 = vpop.f32.mrb[0].mxu0
    %v716 = vadd.f32 0.0, %v715
    %717 = vdwg.mxu0
    %v718 = vmax.f32 %v323, %v325
    %v719 = vmax.f32 %v329, %v331
    %v720 = vmax.f32 %v400, %v402
    %v721 = vmax.f32 %v406, %v408
    %v722 = vmax.f32 %v477, %v479
    %v723 = vmax.f32 %v483, %v485
    %v724 = vmax.f32 %v554, %v556
    %v725 = vmax.f32 %v560, %v562
    %v726 = vmax.f32 %v631, %v633
    %v727 = vmax.f32 %v637, %v639
    %v728 = vmax.f32 %v708, %v710
    %v729 = vmax.f32 %v714, %v716
    %v730 = vmax.f32 %v718, %v720
    %v731 = vmax.f32 %v719, %v721
    %v732 = vmax.f32 %v722, %v724
    %v733 = vmax.f32 %v723, %v725
    %v734 = vmax.f32 %v726, %v728
    %v735 = vmax.f32 %v727, %v729
    %v736 = vmax.f32 %v730, %v732
    %v737 = vmax.f32 %v731, %v733
    %v738 = vmax.f32 %v736, %v734
    %v739 = vmax.f32 %v737, %v735
    %v740 = vld [vmem:[%s2] sm:$0x1]
    %v742 = vlaneseq
    %v743 = vshrl.u32 %v742, 7
    %v744 = vsub.s32 0, %v743
    %v745 = vrot.slane %v740, %v744
    %v747 = vadd.f32 %v738, %v745
    %v748 = vadd.f32 %v739, %v745
    %v749 = vmax.f32 %v747, 0.0
    %v750 = vmax.f32 %v748, 0.0
    %v751 = vld [vmem:[#allocation7] sm:$0xff]
    %v752 = vld [vmem:[#allocation7 + $0x8] sm:$0xff]
    %v753 = vld [vmem:[#allocation7 + $0x10] sm:$0xff]
    %v754 = vld [vmem:[#allocation7 + $0x18] sm:$0xff]
    %v755 = vld [vmem:[#allocation7 + $0x20] sm:$0xff]
    %v756 = vld [vmem:[#allocation7 + $0x28] sm:$0xff]
    %v757 = vld [vmem:[#allocation7 + $0x30] sm:$0xff]
    %v758 = vld [vmem:[#allocation7 + $0x38] sm:$0xff]
    %v759 = vld [vmem:[#allocation7 + $0x40] sm:$0xff]
    %v760 = vld [vmem:[#allocation7 + $0x48] sm:$0xff]
    %v761 = vld [vmem:[#allocation7 + $0x50] sm:$0xff]
    %v762 = vld [vmem:[#allocation7 + $0x58] sm:$0xff]
    %v763 = vld [vmem:[#allocation7 + $0x60] sm:$0xff]
    %v764 = vld [vmem:[#allocation7 + $0x68] sm:$0xff]
    %v765 = vld [vmem:[#allocation7 + $0x70] sm:$0xff]
    %v766 = vld [vmem:[#allocation7 + $0x78] sm:$0xff]
    %v767 = vld [vmem:[#allocation7 + $0x80] sm:$0xff]
    %v768 = vld [vmem:[#allocation7 + $0x88] sm:$0xff]
    %v769 = vld [vmem:[#allocation7 + $0x90] sm:$0xff]
    %v770 = vld [vmem:[#allocation7 + $0x98] sm:$0xff]
    %v771 = vld [vmem:[#allocation7 + $0xa0] sm:$0xff]
    %v772 = vld [vmem:[#allocation7 + $0xa8] sm:$0xff]
    %v773 = vld [vmem:[#allocation7 + $0xb0] sm:$0xff]
    %v774 = vld [vmem:[#allocation7 + $0xb8] sm:$0xff]
    %v775 = vld [vmem:[#allocation7 + $0xc0] sm:$0xff]
    %v776 = vld [vmem:[#allocation7 + $0xc8] sm:$0xff]
    %v777 = vld [vmem:[#allocation7 + $0xd0] sm:$0xff]
    %v778 = vld [vmem:[#allocation7 + $0xd8] sm:$0xff]
    %v779 = vld [vmem:[#allocation7 + $0xe0] sm:$0xff]
    %v780 = vld [vmem:[#allocation7 + $0xe8] sm:$0xff]
    %v781 = vld [vmem:[#allocation7 + $0xf0] sm:$0xff]
    %v782 = vld [vmem:[#allocation7 + $0xf8] sm:$0xff]
    %v783 = vld [vmem:[%s4] sm:$0x3]
    %v785 = vlaneseq
    %v786 = vshrl.u32 %v785, 7
    %v787 = vsub.s32 0, %v786
    %v788 = vrot.slane %v783, %v787
    %v789 = vlaneseq
    %v790 = vshrl.u32 %v789, 7
    %v791 = vsub.s32 1, %v790
    %v792 = vrot.slane %v783, %v791
    %795 = vmatprep.subr.mxu0 %v752
    %796 = vmatpush1.msra.mxu0 %v751
    %797 = vmatprep.subr.mxu0 %v754
    %798 = vmatpush1.msra.mxu0 %v753
    %799 = vmatprep.subr.mxu0 %v756
    %800 = vmatpush1.msra.mxu0 %v755
    %801 = vmatprep.subr.mxu0 %v758
    %802 = vmatpush1.msra.mxu0 %v757
    %803 = vmatprep.subr.mxu0 %v760
    %804 = vmatpush1.msra.mxu0 %v759
    %805 = vmatprep.subr.mxu0 %v762
    %806 = vmatpush1.msra.mxu0 %v761
    %807 = vmatprep.subr.mxu0 %v764
    %808 = vmatpush1.msra.mxu0 %v763
    %809 = vmatprep.subr.mxu0 %v766
    %810 = vmatpush1.msra.mxu0 %v765
    %811 = vmatprep.subr.mxu0 %v768
    %812 = vmatpush1.msra.mxu0 %v767
    %813 = vmatprep.subr.mxu0 %v770
    %814 = vmatpush1.msra.mxu0 %v769
    %815 = vmatprep.subr.mxu0 %v772
    %816 = vmatpush1.msra.mxu0 %v771
    %817 = vmatprep.subr.mxu0 %v774
    %818 = vmatpush1.msra.mxu0 %v773
    %819 = vmatprep.subr.mxu0 %v776
    %820 = vmatpush1.msra.mxu0 %v775
    %821 = vmatprep.subr.mxu0 %v778
    %822 = vmatpush1.msra.mxu0 %v777
    %823 = vmatprep.subr.mxu0 %v780
    %824 = vmatpush1.msra.mxu0 %v779
    %825 = vmatprep.subr.mxu0 %v782
    %826 = vmatpush1.msra.mxu0 %v781
    %827 = vmatprep.subr.mxu0 0.0
    %828 = vmatpush1.msra.mxu0 0.0
    %829 = vmatprep.subr.mxu0 0.0
    %830 = vmatpush1.msra.mxu0 0.0
    %831 = vmatprep.subr.mxu0 0.0
    %832 = vmatpush1.msra.mxu0 0.0
    %833 = vmatprep.subr.mxu0 0.0
    %834 = vmatpush1.msra.mxu0 0.0
    %835 = vmatprep.subr.mxu0 0.0
    %836 = vmatpush1.msra.mxu0 0.0
    %837 = vmatprep.subr.mxu0 0.0
    %838 = vmatpush1.msra.mxu0 0.0
    %839 = vmatprep.subr.mxu0 0.0
    %840 = vmatpush1.msra.mxu0 0.0
    %841 = vmatprep.subr.mxu0 0.0
    %842 = vmatpush1.msra.mxu0 0.0
    %843 = vmatprep.subr.mxu0 0.0
    %844 = vmatpush1.msra.mxu0 0.0
    %845 = vmatprep.subr.mxu0 0.0
    %846 = vmatpush1.msra.mxu0 0.0
    %847 = vmatprep.subr.mxu0 0.0
    %848 = vmatpush1.msra.mxu0 0.0
    %849 = vmatprep.subr.mxu0 0.0
    %850 = vmatpush1.msra.mxu0 0.0
    %851 = vmatprep.subr.mxu0 0.0
    %852 = vmatpush1.msra.mxu0 0.0
    %853 = vmatprep.subr.mxu0 0.0
    %854 = vmatpush1.msra.mxu0 0.0
    %855 = vmatprep.subr.mxu0 0.0
    %856 = vmatpush1.msra.mxu0 0.0
    %857 = vmatprep.subr.mxu0 0.0
    %858 = vmatpush1.msra.mxu0 0.0
    %859 = vmatprep.mubr.f32.mxu0 0.0
    %860 = vmatmul.mubr.f32.gmra.mrb[0].mxu0 %v749
    %v861 = vpop.f32.mrb[0].mxu0
    %v862 = vadd.f32 %v788, %v861
    %v863 = vpop.f32.mrb[0].mxu0
    %v864 = vadd.f32 %v792, %v863
    %865 = vmatprep.mubr.f32.mxu0 0.0
    %866 = vmatmul.mubr.f32.gmra.mrb[0].mxu0 %v750
    %v867 = vpop.f32.mrb[0].mxu0
    %v868 = vadd.f32 %v788, %v867
    %v869 = vpop.f32.mrb[0].mxu0
    %v870 = vadd.f32 %v792, %v869
    %871 = vdwg.mxu0
    %v872 = vxor.u32 %v862, 2147483648
    %v873 = vxor.u32 %v868, 2147483648
    %v874 = vmul.f32 %v872, 1.442695
    %v875 = vpow.pop %v874
    %v876 = vmul.f32 %v873, 1.442695
    %v877 = vpow.pop %v876
    %v878 = vadd.f32 %v875, 1.0
    %v879 = vadd.f32 %v877, 1.0
    %v880 = vrcp.pop %v878
    %v881 = vmul.f32 1.0, %v880
    %v882 = vrcp.pop %v879
    %v883 = vmul.f32 1.0, %v882
    %v884 = vmax.f32 %v864, 0.0
    %v885 = vmax.f32 %v870, 0.0
    %v886 = vmul.f32 %v881, %v884
    %v887 = vmul.f32 %v883, %v885
    %v888 = vsub.f32 1.0, %v881
    %v889 = vsub.f32 1.0, %v883
    %v890 = vmul.f32 %v888, %v749
    %v891 = vmul.f32 %v889, %v750
    %v892 = vadd.f32 %v886, %v890
    %v893 = vadd.f32 %v887, %v891
    %s894 = scalar_lea.vmem [#allocation7], 256
    %v895 = vld [vmem:[%s894] sm:$0xff]
    %v896 = vld [vmem:[%s894 + $0x8] sm:$0xff]
    %v897 = vld [vmem:[%s894 + $0x10] sm:$0xff]
    %v898 = vld [vmem:[%s894 + $0x18] sm:$0xff]
    %v899 = vld [vmem:[%s894 + $0x20] sm:$0xff]
    %v900 = vld [vmem:[%s894 + $0x28] sm:$0xff]
    %v901 = vld [vmem:[%s894 + $0x30] sm:$0xff]
    %v902 = vld [vmem:[%s894 + $0x38] sm:$0xff]
    %v903 = vld [vmem:[%s894 + $0x40] sm:$0xff]
    %v904 = vld [vmem:[%s894 + $0x48] sm:$0xff]
    %v905 = vld [vmem:[%s894 + $0x50] sm:$0xff]
    %v906 = vld [vmem:[%s894 + $0x58] sm:$0xff]
    %v907 = vld [vmem:[%s894 + $0x60] sm:$0xff]
    %v908 = vld [vmem:[%s894 + $0x68] sm:$0xff]
    %v909 = vld [vmem:[%s894 + $0x70] sm:$0xff]
    %v910 = vld [vmem:[%s894 + $0x78] sm:$0xff]
    %v911 = vld [vmem:[%s894 + $0x80] sm:$0xff]
    %v912 = vld [vmem:[%s894 + $0x88] sm:$0xff]
    %v913 = vld [vmem:[%s894 + $0x90] sm:$0xff]
    %v914 = vld [vmem:[%s894 + $0x98] sm:$0xff]
    %v915 = vld [vmem:[%s894 + $0xa0] sm:$0xff]
    %v916 = vld [vmem:[%s894 + $0xa8] sm:$0xff]
    %v917 = vld [vmem:[%s894 + $0xb0] sm:$0xff]
    %v918 = vld [vmem:[%s894 + $0xb8] sm:$0xff]
    %v919 = vld [vmem:[%s894 + $0xc0] sm:$0xff]
    %v920 = vld [vmem:[%s894 + $0xc8] sm:$0xff]
    %v921 = vld [vmem:[%s894 + $0xd0] sm:$0xff]
    %v922 = vld [vmem:[%s894 + $0xd8] sm:$0xff]
    %v923 = vld [vmem:[%s894 + $0xe0] sm:$0xff]
    %v924 = vld [vmem:[%s894 + $0xe8] sm:$0xff]
    %v925 = vld [vmem:[%s894 + $0xf0] sm:$0xff]
    %v926 = vld [vmem:[%s894 + $0xf8] sm:$0xff]
    %s927 = scalar_lea.vmem %s4, 2
    %v928 = vld [vmem:[%s927] sm:$0x3]
    %v930 = vlaneseq
    %v931 = vshrl.u32 %v930, 7
    %v932 = vsub.s32 0, %v931
    %v933 = vrot.slane %v928, %v932
    %v934 = vlaneseq
    %v935 = vshrl.u32 %v934, 7
    %v936 = vsub.s32 1, %v935
    %v937 = vrot.slane %v928, %v936
    %940 = vmatprep.subr.mxu0 %v896
    %941 = vmatpush1.msra.mxu0 %v895
    %942 = vmatprep.subr.mxu0 %v898
    %943 = vmatpush1.msra.mxu0 %v897
    %944 = vmatprep.subr.mxu0 %v900
    %945 = vmatpush1.msra.mxu0 %v899
    %946 = vmatprep.subr.mxu0 %v902
    %947 = vmatpush1.msra.mxu0 %v901
    %948 = vmatprep.subr.mxu0 %v904
    %949 = vmatpush1.msra.mxu0 %v903
    %950 = vmatprep.subr.mxu0 %v906
    %951 = vmatpush1.msra.mxu0 %v905
    %952 = vmatprep.subr.mxu0 %v908
    %953 = vmatpush1.msra.mxu0 %v907
    %954 = vmatprep.subr.mxu0 %v910
    %955 = vmatpush1.msra.mxu0 %v909
    %956 = vmatprep.subr.mxu0 %v912
    %957 = vmatpush1.msra.mxu0 %v911
    %958 = vmatprep.subr.mxu0 %v914
    %959 = vmatpush1.msra.mxu0 %v913
    %960 = vmatprep.subr.mxu0 %v916
    %961 = vmatpush1.msra.mxu0 %v915
    %962 = vmatprep.subr.mxu0 %v918
    %963 = vmatpush1.msra.mxu0 %v917
    %964 = vmatprep.subr.mxu0 %v920
    %965 = vmatpush1.msra.mxu0 %v919
    %966 = vmatprep.subr.mxu0 %v922
    %967 = vmatpush1.msra.mxu0 %v921
    %968 = vmatprep.subr.mxu0 %v924
    %969 = vmatpush1.msra.mxu0 %v923
    %970 = vmatprep.subr.mxu0 %v926
    %971 = vmatpush1.msra.mxu0 %v925
    %972 = vmatprep.subr.mxu0 0.0
    %973 = vmatpush1.msra.mxu0 0.0
    %974 = vmatprep.subr.mxu0 0.0
    %975 = vmatpush1.msra.mxu0 0.0
    %976 = vmatprep.subr.mxu0 0.0
    %977 = vmatpush1.msra.mxu0 0.0
    %978 = vmatprep.subr.mxu0 0.0
    %979 = vmatpush1.msra.mxu0 0.0
    %980 = vmatprep.subr.mxu0 0.0
    %981 = vmatpush1.msra.mxu0 0.0
    %982 = vmatprep.subr.mxu0 0.0
    %983 = vmatpush1.msra.mxu0 0.0
    %984 = vmatprep.subr.mxu0 0.0
    %985 = vmatpush1.msra.mxu0 0.0
    %986 = vmatprep.subr.mxu0 0.0
    %987 = vmatpush1.msra.mxu0 0.0
    %988 = vmatprep.subr.mxu0 0.0
    %989 = vmatpush1.msra.mxu0 0.0
    %990 = vmatprep.subr.mxu0 0.0
    %991 = vmatpush1.msra.mxu0 0.0
    %992 = vmatprep.subr.mxu0 0.0
    %993 = vmatpush1.msra.mxu0 0.0
    %994 = vmatprep.subr.mxu0 0.0
    %995 = vmatpush1.msra.mxu0 0.0
    %996 = vmatprep.subr.mxu0 0.0
    %997 = vmatpush1.msra.mxu0 0.0
    %998 = vmatprep.subr.mxu0 0.0
    %999 = vmatpush1.msra.mxu0 0.0
    %1000 = vmatprep.subr.mxu0 0.0
    %1001 = vmatpush1.msra.mxu0 0.0
    %1002 = vmatprep.subr.mxu0 0.0
    %1003 = vmatpush1.msra.mxu0 0.0
    %1004 = vmatprep.mubr.f32.mxu0 0.0
    %1005 = vmatmul.mubr.f32.gmra.mrb[0].mxu0 %v892
    %v1006 = vpop.f32.mrb[0].mxu0
    %v1007 = vadd.f32 %v933, %v1006
    %v1008 = vpop.f32.mrb[0].mxu0
    %v1009 = vadd.f32 %v937, %v1008
    %1010 = vmatprep.mubr.f32.mxu0 0.0
    %1011 = vmatmul.mubr.f32.gmra.mrb[0].mxu0 %v893
    %v1012 = vpop.f32.mrb[0].mxu0
    %v1013 = vadd.f32 %v933, %v1012
    %v1014 = vpop.f32.mrb[0].mxu0
    %v1015 = vadd.f32 %v937, %v1014
    %1016 = vdwg.mxu0
    %v1017 = vxor.u32 %v1007, 2147483648
    %v1018 = vxor.u32 %v1013, 2147483648
    %v1019 = vmul.f32 %v1017, 1.442695
    %v1020 = vpow.pop %v1019
    %v1021 = vmul.f32 %v1018, 1.442695
    %v1022 = vpow.pop %v1021
    %v1023 = vadd.f32 %v1020, 1.0
    %v1024 = vadd.f32 %v1022, 1.0
    %v1025 = vrcp.pop %v1023
    %v1026 = vmul.f32 1.0, %v1025
    %v1027 = vrcp.pop %v1024
    %v1028 = vmul.f32 1.0, %v1027
    %v1029 = vmax.f32 %v1009, 0.0
    %v1030 = vmax.f32 %v1015, 0.0
    %v1031 = vmul.f32 %v1026, %v1029
    %v1032 = vmul.f32 %v1028, %v1030
    %v1033 = vsub.f32 1.0, %v1026
    %v1034 = vsub.f32 1.0, %v1028
    %v1035 = vmul.f32 %v1033, %v892
    %v1036 = vmul.f32 %v1034, %v893
    %v1037 = vadd.f32 %v1031, %v1035
    %v1038 = vadd.f32 %v1032, %v1036
    %1039 = vst [vmem:[#allocation8] sm:$0xff] %v1037
    %1040 = vst [vmem:[#allocation8 + $0x8] sm:$0xff] %v1038
    // Predicated region
    $region34: #{tpu_custom_call.1} parent=1 // pred_check
      _
    $region35: #{tpu_custom_call.1} parent=1 // pred_check_branch
      %1042 = sbr.rel (0) target = $region37
    $region36: #{tpu_custom_call.1} parent=1 // pred_region
      %s1044 = ssub.s32 256, 256
      %1045 = vsyncadd [#allocation4], %s1044
      %s1046 = sshll.u32 [#allocation8], 4
      %s1047 = int_to_ptr.vmem [resolvable:$true] %s1046
      %1052 = dma.vmem_to_hbm [thread:$0]  %s1047, 256, %s5, [#allocation4], 128, 128, 8
    $region37: #{tpu_custom_call.1} parent=1 // pred_fallthru
      _
    // Predicated region
    $region38: #{tpu_custom_call.1} parent=1 // pred_check
      _
    $region39: #{tpu_custom_call.1} parent=1 // pred_check_branch
      %1054 = sbr.rel (0) target = $region41
    $region40: #{tpu_custom_call.1} parent=1 // pred_region
      %1055 = dma.done [#allocation4], 256
    $region41: #{tpu_custom_call.1} parent=1 // pred_fallthru
      _
    %1056 = vsyncpa [#allocation3], 1
    %1057 = vsyncpa [#allocation6], 1
    %1058 = vsyncpa [#allocation4], 1

</llo_original>
